<compile_context>
chip_gen: v5e
topology: v5e:2x2
jax: 0.10.0
libtpu: 0.0.40
codegen_flags: <defaults>
</compile_context>

<pallas_src>
import functools

import jax
import jax.numpy as jnp
import numpy as np
from jax.experimental import pallas as pl
from jax.experimental.pallas import tpu as pltpu


def _cpad(c):
    """Pad a channel count up to a multiple of 16 (bf16 sublane tile)."""
    return ((c + 15) // 16) * 16


# ---------------------------------------------------------------------------
# Per-resolution geometry: zero-padded (pad=1) volume, flattened, lane aligned.
# Every position outside the D*H*W interior is kept at exactly 0 so that the
# in-kernel shifted reads see correct conv zero-padding.
# ---------------------------------------------------------------------------
class Geom:
    def __init__(self, D, H, W):
        self.D, self.H, self.W = D, H, W
        self.Dp, self.Hp, self.Wp = D + 2, H + 2, W + 2
        self.HpWp = self.Hp * self.Wp
        self.Mp = self.Dp * self.HpWp
        self.Mext = ((self.Mp + 127) // 128) * 128
        m = np.zeros((self.Dp, self.Hp, self.Wp), np.float32)
        m[1:1 + D, 1:1 + H, 1:1 + W] = 1.0
        m = m.reshape(1, self.Mp)
        m = np.pad(m, ((0, 0), (0, self.Mext - self.Mp)))
        self.mask = jnp.asarray(m)          # (1, Mext) f32 interior mask


def to_padded_flat(v, geom, c_pad=None, dtype=jnp.bfloat16):
    """(N, C, D, H, W) -> (N, c_pad, Mext) centered padded-flat layout."""
    N, C = v.shape[:2]
    if c_pad is None:
        c_pad = C
    vp = jnp.pad(v, ((0, 0), (0, c_pad - C), (1, 1), (1, 1), (1, 1)))
    vf = vp.reshape(N, c_pad, geom.Mp)
    if geom.Mext > geom.Mp:
        vf = jnp.pad(vf, ((0, 0), (0, 0), (0, geom.Mext - geom.Mp)))
    return vf.astype(dtype)


def from_padded_flat(a, geom):
    """(N, C, Mext) -> (N, C, D, H, W)."""
    N, C = a.shape[:2]
    vp = a[:, :, :geom.Mp].reshape(N, C, geom.Dp, geom.Hp, geom.Wp)
    return vp[:, :, 1:1 + geom.D, 1:1 + geom.H, 1:1 + geom.W]


def max_pool3d_2(v):                        # NCDHW
    N, C, D, H, W = v.shape
    return v.reshape(N, C, D // 2, 2, H // 2, 2, W // 2, 2).max(axis=(3, 5, 7))


def upsample_nearest_2(v):                  # NCDHW
    v = jnp.repeat(v, 2, axis=2)
    v = jnp.repeat(v, 2, axis=3)
    return jnp.repeat(v, 2, axis=4)


# ---------------------------------------------------------------------------
# Probe pltpu.roll's rotation convention once (so conv tap offsets are never
# silently mirrored).  Returns m such that
#   pltpu.roll(x, (m*delta) % n, axis=-1)[..., p] == x[..., p + delta].
# ---------------------------------------------------------------------------
def _detect_roll_direction():
    def k(x_ref, o_ref):
        o_ref[...] = pltpu.roll(x_ref[...], 1, axis=1)

    x = jax.lax.broadcasted_iota(jnp.int32, (8, 128), 1)
    y = pl.pallas_call(k, out_shape=jax.ShapeDtypeStruct((8, 128), jnp.int32))(x)
    return -1 if int(y[0, 0]) == 127 else 1   # 127 -> np.roll convention


# ---------------------------------------------------------------------------
# Fused conv-chain kernel: runs 2-3 convs of one resolution level back to back.
# Per conv: build the 27-tap stacked LHS in VMEM, one MXU contraction,
# shift + activation [+ post-activation residual] [+ interior mask] epilogue.
# ---------------------------------------------------------------------------
def _make_chain_kernel(chain_cfg):
    """chain_cfg: tuple of dicts with STATIC fields only:
       cin_pad, cout_pad, kk (27 or 1), shifts (tuple|None), act, residual
       (bool), mask (bool)."""
    n_convs = len(chain_cfg)
    has_stack = any(c["kk"] > 1 for c in chain_cfg)

    def kernel(*refs):
        it = iter(refs)
        x_ref = next(it)
        w_refs, t_refs, r_refs = [], [], []
        for c in chain_cfg:
            w_refs.append(next(it))
            t_refs.append(next(it))
            r_refs.append(next(it) if c["residual"] else None)
        m_ref = next(it)
        o_ref = next(it)
        stacked_ref = next(it) if has_stack else None
        act_refs = list(it)                       # one per intermediate conv

        cur = x_ref
        for ci, c in enumerate(chain_cfg):
            cin_pad, cout_pad, kk = c["cin_pad"], c["cout_pad"], c["kk"]
            w = w_refs[ci][...]                   # (cout_pad, kk*cin_pad) bf16
            if kk > 1:
                # 27 lane-rolled copies of the activation -> stacked VMEM LHS.
                # Re-read cur[...] per tap so the full tile is never a long-
                # lived vreg value (keeps load slots, not spills, as the cost).
                for ti, sh in enumerate(c["shifts"]):
                    v = cur[...]                  # (cin_pad, Mext) bf16
                    if sh:
                        v = pltpu.roll(v, sh, axis=1)
                    stacked_ref[pl.ds(ti * cin_pad, cin_pad), :] = v
                rhs = stacked_ref[pl.ds(0, kk * cin_pad), :]
            else:                                 # 1x1x1 conv
                rhs = cur[...]
            # Single MXU contraction with K = kk*cin_pad, f32 accumulation.
            acc = jnp.dot(w, rhs, preferred_element_type=jnp.float32)
            acc = acc + t_refs[ci][...]           # folded bias / BN shift
            if c["act"] == "relu":
                acc = jnp.maximum(acc, 0.0)
            elif c["act"] == "sigmoid":
                acc = jax.nn.sigmoid(acc)
            if r_refs[ci] is not None:
                acc = acc + r_refs[ci][...].astype(jnp.float32)
            if c["mask"]:
                acc = acc * m_ref[...]            # zero halo/tail for next conv
            if ci == n_convs - 1:
                o_ref[...] = acc.astype(o_ref.dtype)
            else:
                act_refs[ci][...] = acc.astype(act_refs[ci].dtype)
                cur = act_refs[ci]

    return kernel


def run_chain(x, convs, geom, *, roll_sign, out_dtype=jnp.bfloat16):
    """x: (N, cin_pad0, Mext) bf16 padded-flat activation.
       convs: list of dicts with arrays w2 (CoutPad, K) bf16, t2 (CoutPad, 1)
       f32, optional residual (N, CoutPad, Mext), plus static conv config."""
    N, cin_pad0, Mext = x.shape
    assert Mext == geom.Mext and cin_pad0 == convs[0]["cin_pad"]

    deltas3 = [(kd - 1) * geom.HpWp + (kh - 1) * geom.Wp + (kw - 1)
               for kd in range(3) for kh in range(3) for kw in range(3)]
    shifts3 = tuple((roll_sign * d) % Mext for d in deltas3)

    chain_cfg = []
    in_specs = [pl.BlockSpec((None, cin_pad0, Mext), lambda n: (n, 0, 0))]
    args = [x]
    for c in convs:
        cout_pad, K = c["w2"].shape
        in_specs.append(pl.BlockSpec((cout_pad, K), lambda n: (0, 0)))
        args.append(c["w2"])
        in_specs.append(pl.BlockSpec((cout_pad, 1), lambda n: (0, 0)))
        args.append(c["t2"])
        if c["residual"] is not None:
            in_specs.append(pl.BlockSpec((None, cout_pad, Mext), lambda n: (n, 0, 0)))
            args.append(c["residual"])
        chain_cfg.append(dict(
            cin_pad=c["cin_pad"], cout_pad=cout_pad, kk=c["kk"],
            shifts=shifts3 if c["kk"] > 1 else None,
            act=c["act"], residual=c["residual"] is not None, mask=c["mask"]))
    in_specs.append(pl.BlockSpec((1, Mext), lambda n: (0, 0)))
    args.append(geom.mask)

    cout_last = convs[-1]["w2"].shape[0]
    out_shape = jax.ShapeDtypeStruct((N, cout_last, Mext), out_dtype)
    out_spec = pl.BlockSpec((None, cout_last, Mext), lambda n: (n, 0, 0))

    scratch = []
    stack_rows = max((cfg["kk"] * cfg["cin_pad"] for cfg in chain_cfg
                      if cfg["kk"] > 1), default=0)
    if stack_rows:
        scratch.append(pltpu.VMEM((stack_rows, Mext), jnp.bfloat16))
    for cfg in chain_cfg[:-1]:
        scratch.append(pltpu.VMEM((cfg["cout_pad"], Mext), jnp.bfloat16))

    kernel = _make_chain_kernel(tuple(chain_cfg))
    return pl.pallas_call(
        kernel,
        out_shape=out_shape,
        grid=(N,),
        in_specs=in_specs,
        out_specs=out_spec,
        scratch_shapes=scratch,
        compiler_params=pltpu.CompilerParams(
            dimension_semantics=("parallel",),       # batch elem per TC (v7x)
            vmem_limit_bytes=48 * 1024 * 1024),      # headroom for the stacked
                                                      # scratch + compiler temps
    )(*args)


# ---------------------------------------------------------------------------
# Parameters (deterministic synthetic init)
# ---------------------------------------------------------------------------
CONV_SPECS = {
    "conv0a": (1, 12, 3), "conv0b": (12, 12, 3),
    "conv1a": (12, 12, 3), "conv1b": (12, 12, 3),
    "conv2a": (12, 16, 3), "conv2b": (16, 16, 3),
    "conv3a": (16, 32, 3), "conv3b": (32, 24, 3),
    "conv2u": (24, 16, 3), "conv2v": (16, 16, 3),
    "conv1u": (16, 12, 3), "conv1v": (12, 12, 3),
    "conv0u": (12, 12, 3), "conv0v": (12, 12, 3),
    "conv1x": (12, 3, 1),
}
BN_SPECS = {"bn0a": 12, "bn1a": 12, "bn2a": 16, "bn3a": 24,
            "bn2u": 16, "bn1u": 12, "bn0u": 12}
BN_EPS = 1e-5


def build_params(key):
    params = {}
    keys = jax.random.split(key, len(CONV_SPECS) + len(BN_SPECS))
    ki = 0
    for name, (cin, cout, k) in CONV_SPECS.items():
        kw, kb = jax.random.split(keys[ki]); ki += 1
        fan_in = cin * k ** 3
        w = jax.random.normal(kw, (k, k, k, cin, cout), jnp.float32) / jnp.sqrt(fan_in)
        b = 0.01 * jax.random.normal(kb, (cout,), jnp.float32)
        params[name] = (w, b)
    for name, c in BN_SPECS.items():
        kg, kb, km, kv = jax.random.split(keys[ki], 4); ki += 1
        gamma = 1.0 + 0.1 * jax.random.normal(kg, (c,), jnp.float32)
        beta = 0.1 * jax.random.normal(kb, (c,), jnp.float32)
        mean = 0.1 * jax.random.normal(km, (c,), jnp.float32)
        var = 1.0 + 0.1 * jax.random.uniform(kv, (c,), jnp.float32)
        params[name] = (gamma, beta, mean, var)
    return params


def _fold_bn(bias, bn_params):
    """Fold conv bias (+ optional eval-mode BN) into per-channel scale/shift."""
    if bn_params is None:
        return jnp.ones_like(bias), bias
    gamma, beta, mean, var = bn_params
    s = gamma / jnp.sqrt(var + BN_EPS)
    t = (bias - mean) * s + beta
    return s, t


def _prep_conv(P, name, bn, cin_pad, cout_pad):
    """Fold BN scale into weights; lay out as (CoutPad, kk*CinPad) tap-major."""
    w, b = P[name]
    s, t = _fold_bn(b, P[bn] if bn is not None else None)
    kk = w.shape[0] * w.shape[1] * w.shape[2]
    cin, cout = w.shape[3], w.shape[4]
    wf = (w * s).reshape(kk, cin, cout).transpose(2, 0, 1)        # (cout, kk, cin)
    wf = jnp.pad(wf, ((0, cout_pad - cout), (0, 0), (0, cin_pad - cin)))
    wf = wf.reshape(cout_pad, kk * cin_pad).astype(jnp.bfloat16)
    t2 = jnp.pad(t, (0, cout_pad - cout)).reshape(cout_pad, 1).astype(jnp.float32)
    return wf, t2


# ---------------------------------------------------------------------------
# Forward pass (mirrors JawsModel2.forward; activations are NCDHW like torch)
# ---------------------------------------------------------------------------
def jaws_forward(x, P, *, roll_sign=-1):
    N, _, D, H, W = x.shape
    g0 = Geom(D, H, W)
    g1 = Geom(D // 2, H // 2, W // 2)
    g2 = Geom(D // 4, H // 4, W // 4)
    g3 = Geom(D // 8, H // 8, W // 8)

    def conv_cfg(name, bn=None, act="relu", residual=None, mask=True):
        cin, cout, k = CONV_SPECS[name]
        cin_pad, cout_pad = _cpad(cin), _cpad(cout)
        w2, t2 = _prep_conv(P, name, bn, cin_pad, cout_pad)
        return dict(w2=w2, t2=t2, cin_pad=cin_pad, kk=k ** 3,
                    act=act, residual=residual, mask=mask)

    def down(a, g_from, g_to):
        return to_padded_flat(max_pool3d_2(from_padded_flat(a, g_from)), g_to)

    def up(a, g_from, g_to):
        return to_padded_flat(upsample_nearest_2(from_padded_flat(a, g_from)), g_to)

    a = to_padded_flat(x, g0, c_pad=_cpad(1))

    # --- encoder -----------------------------------------------------------
    li0 = a = run_chain(a, [conv_cfg("conv0a"),
                            conv_cfg("conv0b", bn="bn0a")], g0, roll_sign=roll_sign)
    a = down(a, g0, g1)
    li1 = a = run_chain(a, [conv_cfg("conv1a"),
                            conv_cfg("conv1b", bn="bn1a")], g1, roll_sign=roll_sign)
    a = down(a, g1, g2)
    li2 = a = run_chain(a, [conv_cfg("conv2a"),
                            conv_cfg("conv2b", bn="bn2a")], g2, roll_sign=roll_sign)
    a = down(a, g2, g3)
    a = run_chain(a, [conv_cfg("conv3a"),
                      conv_cfg("conv3b", bn="bn3a", mask=False)], g3,
                  roll_sign=roll_sign)

    # --- decoder (skip connections added post-activation, as in the module) -
    a = up(a, g3, g2)
    a = run_chain(a, [conv_cfg("conv2u", bn="bn2u", residual=li2),
                      conv_cfg("conv2v", mask=False)], g2, roll_sign=roll_sign)
    a = up(a, g2, g1)
    a = run_chain(a, [conv_cfg("conv1u", bn="bn1u", residual=li1),
                      conv_cfg("conv1v", mask=False)], g1, roll_sign=roll_sign)
    a = up(a, g1, g0)
    a = run_chain(a, [conv_cfg("conv0u", bn="bn0u", residual=li0),
                      conv_cfg("conv0v", mask=False),
                      conv_cfg("conv1x", act="sigmoid", mask=False)],
                  g0, roll_sign=roll_sign, out_dtype=jnp.float32)

    return from_padded_flat(a, g0)[:, :3]


# ---------------------------------------------------------------------------
# Pure-JAX f32 reference (correctness check only)
# ---------------------------------------------------------------------------
def ref_forward(x, P):
    def conv(name, x, bn=None, act="relu", residual=None):
        w, b = P[name]
        k = CONV_SPECS[name][2]
        pad = 1 if k == 3 else 0
        y = jax.lax.conv_general_dilated(
            x, w, window_strides=(1, 1, 1), padding=[(pad, pad)] * 3,
            dimension_numbers=("NCDHW", "DHWIO", "NCDHW"))
        y = y + b.reshape(1, -1, 1, 1, 1)
        if bn is not None:
            gamma, beta, mean, var = P[bn]
            rs = lambda v: v.reshape(1, -1, 1, 1, 1)
            y = (y - rs(mean)) / jnp.sqrt(rs(var) + BN_EPS) * rs(gamma) + rs(beta)
        if act == "relu":
            y = jnp.maximum(y, 0.0)
        elif act == "sigmoid":
            y = jax.nn.sigmoid(y)
        if residual is not None:
            y = y + residual
        return y

    x = conv("conv0a", x)
    li0 = x = conv("conv0b", x, bn="bn0a")
    x = max_pool3d_2(x)
    x = conv("conv1a", x)
    li1 = x = conv("conv1b", x, bn="bn1a")
    x = max_pool3d_2(x)
    x = conv("conv2a", x)
    li2 = x = conv("conv2b", x, bn="bn2a")
    x = max_pool3d_2(x)
    x = conv("conv3a", x)
    x = conv("conv3b", x, bn="bn3a")
    x = upsample_nearest_2(x)
    x = conv("conv2u", x, bn="bn2u", residual=li2)
    x = conv("conv2v", x)
    x = upsample_nearest_2(x)
    x = conv("conv1u", x, bn="bn1u", residual=li1)
    x = conv("conv1v", x)
    x = upsample_nearest_2(x)
    x = conv("conv0u", x, bn="bn0u", residual=li0)
    x = conv("conv0v", x)
    x = conv("conv1x", x, act="sigmoid")
    return x


# ---------------------------------------------------------------------------
if __name__ == "__main__":
    roll_sign = _detect_roll_direction()

    key = jax.random.PRNGKey(0)
    kx, kp = jax.random.split(key)

    # Input: batch=2, 1 channel, 16^3 volume, NCDHW (same layout as PyTorch).
    x = jax.random.normal(kx, (2, 1, 16, 16, 16), jnp.float32)
    params = build_params(kp)

    fwd = jax.jit(functools.partial(jaws_forward, roll_sign=roll_sign))
    y = jax.block_until_ready(fwd(x, params))
    assert y.shape == (2, 3, 16, 16, 16), y.shape
    assert bool(jnp.all(jnp.isfinite(y)))

    # Correctness check against the f32 reference (kernel path runs bf16
    # activations/weights with f32 accumulation -> loosened tolerance).
    y_ref = jax.block_until_ready(jax.jit(ref_forward)(x, params))
    np.testing.assert_allclose(np.asarray(y), np.asarray(y_ref),
                               rtol=3e-2, atol=3e-2)

    print("KERNEL_OK")
</pallas_src>

<mosaic_0001>
module attributes {stable_mosaic.version = 11 : i64} {
  func.func @k(%arg0: memref<8x128xi32, #tpu.memory_space<vmem>>, %arg1: memref<8x128xi32, #tpu.memory_space<vmem>>) attributes {dimension_semantics = [], scalar_prefetch = 0 : i64, scratch_operands = 0 : i64, tpu.core_type = #tpu.core_type<tc>} {
    %c0 = arith.constant 0 : index
    %c0_0 = arith.constant 0 : index
    %0 = vector.load %arg0[%c0, %c0_0] : memref<8x128xi32, #tpu.memory_space<vmem>>, vector<8x128xi32>
    %c1_i32 = arith.constant 1 : i32
    %1 = tpu.dynamic_rotate %0 by %c1_i32 dim 1 : vector<8x128xi32>, i32 -> vector<8x128xi32>
    %c0_1 = arith.constant 0 : index
    %c0_2 = arith.constant 0 : index
    %2 = vector.load %arg1[%c0_1, %c0_2] : memref<8x128xi32, #tpu.memory_space<vmem>>, vector<8x128xi32>
    tpu.vector_store %arg1[%c0_1, %c0_2], %1 {strides = array<i32>} : memref<8x128xi32, #tpu.memory_space<vmem>>, vector<8x128xi32>,
    return
  }
}

</mosaic_0001>

<llo_original>
// kernel: tpu_custom_call.1
$region0: #{tpu_custom_call.1}
  #allocation0 [shape = 'u32[]', space=smem, size = 0x4, offset = 0x4, fixed_abs, tag = 'smem constant byte address 0x4 - core index']
  #allocation1 [shape = 'u32[72,128]{1,0:T(1,128)}', space=vmem, size = 0x9000, scoped, tag = 'internal scratch']
  %s0 = inlined_call_operand.hbm [shape: s32[8,128], index: 0, kind: input, shape index: {}]
  %s1 = inlined_call_operand.hbm [shape: s32[8,128], index: 1, kind: output, shape index: {}]
  %s2 = sld [smem:[#allocation0]]
  $region18: #{tpu_custom_call.1} parent=0
    _
  %s4 = ssub.s32 1, %s2
  %s5 = scalar_select 0, %s4, %s2
  $region1: #{tpu_custom_call.1} parent=0
    #allocation2 [shape = 'u8[4096]{0}', space=vmem, size = 0x1000, scoped, tag = 'input window, operand 0, single buffered']
    #allocation3 [shape = 's32[1]{0}', space=sflag, size = 0x4, scoped, tag = 'scoped memory for tpu_custom_call.1']
    #allocation4 [shape = 's32[1]{0}', space=sflag, size = 0x4, scoped, tag = 'scoped memory for tpu_custom_call.1']
    #allocation5 [shape = 'u8[4096]{0}', space=vmem, size = 0x1000, scoped, tag = 'output window, operand 0, single buffered']
    %6 = vsyncpa [#allocation3], 0
    %7 = vsyncpa [#allocation4], 0
    // Predicated region
    $region2: #{tpu_custom_call.1} parent=1 // pred_check
      _
    $region3: #{tpu_custom_call.1} parent=1 // pred_check_branch
      %9 = sbr.rel (0) target = $region5
    $region4: #{tpu_custom_call.1} parent=1 // pred_region
      %11 = vsyncadd [#allocation3], 0
      %s13 = sshll.u32 %s0, 4
      %s14 = int_to_ptr.hbm [resolvable:$true] %s13
      %s15 = sshll.u32 [#allocation2], 4
      %s16 = int_to_ptr.vmem [resolvable:$true] %s15
      %18 = dma.hbm_to_vmem [thread:$0]  %s14, 128, %s16, [#allocation3]
    $region5: #{tpu_custom_call.1} parent=1 // pred_fallthru
      _
    // Predicated region
    $region6: #{tpu_custom_call.1} parent=1 // pred_check
      _
    $region7: #{tpu_custom_call.1} parent=1 // pred_check_branch
      %20 = sbr.rel (0) target = $region9
    $region8: #{tpu_custom_call.1} parent=1 // pred_region
      %22 = dma.done [#allocation3], 128
    $region9: #{tpu_custom_call.1} parent=1 // pred_fallthru
      _
    %v23 = vld [vmem:[#allocation2] sm:$0xff]
    %24 = vrot.lane.b32.xlu0 %v23, 1
    %v25 = vpop.permute.xlu0 %24
    %26 = vst [vmem:[#allocation5] sm:$0xff] %v25
    // Predicated region
    $region10: #{tpu_custom_call.1} parent=1 // pred_check
      _
    $region11: #{tpu_custom_call.1} parent=1 // pred_check_branch
      %28 = sbr.rel (0) target = $region13
    $region12: #{tpu_custom_call.1} parent=1 // pred_region
      %30 = vsyncadd [#allocation4], 0
      %s32 = sshll.u32 [#allocation5], 4
      %s33 = int_to_ptr.vmem [resolvable:$true] %s32
      %s34 = sshll.u32 %s1, 4
      %s35 = int_to_ptr.hbm [resolvable:$true] %s34
      %37 = dma.vmem_to_hbm [thread:$0]  %s33, 128, %s35, [#allocation4]
    $region13: #{tpu_custom_call.1} parent=1 // pred_fallthru
      _
    // Predicated region
    $region14: #{tpu_custom_call.1} parent=1 // pred_check
      _
    $region15: #{tpu_custom_call.1} parent=1 // pred_check_branch
      %39 = sbr.rel (0) target = $region17
    $region16: #{tpu_custom_call.1} parent=1 // pred_region
      %41 = dma.done [#allocation4], 128
    $region17: #{tpu_custom_call.1} parent=1 // pred_fallthru
      _
    %42 = vsyncpa [#allocation3], 1
    %43 = vsyncpa [#allocation4], 1

</llo_original>
